<compile_context>
chip_gen: v5e
topology: v5e:2x2
jax: 0.10.0
libtpu: 0.0.40
codegen_flags: <defaults>
</compile_context>

<pallas_src>
import math

import jax
import jax.numpy as jnp
from jax.experimental import pallas as pl
from jax.experimental.pallas import tpu as pltpu


# ---------------------------------------------------------------------------
# Kernels
# ---------------------------------------------------------------------------
def _dense_bd_kernel(x_ref, w_ref, o_ref):
    # x_ref: (tm, width) lane-dense; w_ref: (width, width) dense block-diagonal.
    o_ref[...] = jnp.dot(
        x_ref[...], w_ref[...], preferred_element_type=jnp.float32
    ).astype(o_ref.dtype)


def _blocked_bd_kernel(x_ref, w_ref, o_ref):
    # Used only when block_width is already a multiple of 128 (lane dense).
    # x_ref: (tm, num_blocks, bw); w_ref: (num_blocks, bw, bw).
    y = jnp.einsum(
        "nhi,hij->nhj",
        x_ref[...],
        w_ref[...],
        preferred_element_type=jnp.float32,
    )
    o_ref[...] = y.astype(o_ref.dtype)


# ---------------------------------------------------------------------------
# Wrapper
# ---------------------------------------------------------------------------
def _round_up(a, b):
    return ((a + b - 1) // b) * b


def _choose_tm(n, width, itemsize, w_bytes, vmem_budget, tm_max=1024):
    # Double-buffered input + output tiles (2 * 2 * tm * width * itemsize) plus
    # the (double-buffered) weight must fit the VMEM budget.
    avail = vmem_budget - 2 * w_bytes
    tm = max(8, avail // (4 * width * itemsize))
    tm = min(tm, tm_max, _round_up(n, 8))
    if n > 8:
        # Prefer >= 2 grid steps so both v7x TensorCores get work.
        tm = min(tm, _round_up(pl.cdiv(n, 2), 8))
    return max(8, (tm // 8) * 8)


def block_diagonal_linear(
    x,
    w,
    *,
    compute_dtype=None,
    tm=None,
    vmem_budget_bytes=20 * 1024 * 1024,
):
    """x: (..., width); w: (num_blocks, block_width, block_width)."""
    num_blocks, bw, bw2 = w.shape
    assert bw == bw2
    width = num_blocks * bw
    assert x.shape[-1] == width

    out_dtype = x.dtype
    lead_shape = x.shape[:-1]
    n = int(math.prod(lead_shape)) if lead_shape else 1

    if compute_dtype is not None:
        x = x.astype(compute_dtype)
        w = w.astype(compute_dtype)
    itemsize = jnp.dtype(x.dtype).itemsize

    use_dense = (bw % 128) != 0

    if use_dense:
        # Fold the blocks into one dense block-diagonal (width, width) matrix:
        # a K<128 contraction is padded to a full MXU pass anyway, and this
        # gives lane-dense (tm, width) tiles with unmasked stores.
        eye = jnp.eye(num_blocks, dtype=w.dtype)
        w_op = jnp.einsum("hg,hij->higj", eye, w).reshape(width, width)
        x_op = x.reshape(n, width)
        w_bytes = width * width * itemsize
        kernel = _dense_bd_kernel
        x_block = (None, width)  # filled with tm below
        w_block = (width, width)
        x_index_map = lambda i: (i, 0)
        w_index_map = lambda i: (0, 0)
        out_struct_shape = (n, width)
    else:
        # block_width already MXU/lane aligned: keep the per-block contraction.
        w_op = w
        x_op = x.reshape(n, num_blocks, bw)
        w_bytes = num_blocks * bw * bw * itemsize
        kernel = _blocked_bd_kernel
        x_block = (None, num_blocks, bw)
        w_block = (num_blocks, bw, bw)
        x_index_map = lambda i: (i, 0, 0)
        w_index_map = lambda i: (0, 0, 0)
        out_struct_shape = (n, num_blocks, bw)

    if tm is None:
        tm = _choose_tm(n, width, itemsize, w_bytes, vmem_budget_bytes)
    x_block = (tm,) + x_block[1:]
    grid = (pl.cdiv(n, tm),)

    cost = pl.CostEstimate(
        flops=2 * n * num_blocks * bw * bw,
        transcendentals=0,
        bytes_accessed=2 * n * width * itemsize + w_bytes,
    )

    out = pl.pallas_call(
        kernel,
        out_shape=jax.ShapeDtypeStruct(out_struct_shape, out_dtype),
        grid_spec=pltpu.PrefetchScalarGridSpec(
            num_scalar_prefetch=0,
            grid=grid,
            in_specs=[
                pl.BlockSpec(x_block, x_index_map),
                pl.BlockSpec(w_block, w_index_map),  # constant index -> single DMA
            ],
            out_specs=pl.BlockSpec(x_block, x_index_map),
        ),
        compiler_params=pltpu.CompilerParams(
            dimension_semantics=("parallel",),
            vmem_limit_bytes=max(32 * 1024 * 1024, vmem_budget_bytes + (8 << 20)),
        ),
        cost_estimate=cost,
    )(x_op, w_op)

    return out.reshape(*lead_shape, width)


# ---------------------------------------------------------------------------
# Init + reference
# ---------------------------------------------------------------------------
def init_block_diag_weight(key, width, num_blocks, w_init_variance_scale=1.0,
                           dtype=jnp.float32):
    bw = width // num_blocks
    std = math.sqrt(w_init_variance_scale / bw)
    return std * jax.random.normal(key, (num_blocks, bw, bw), dtype=dtype)


def _reference(x, w):
    num_blocks, bw, _ = w.shape
    xr = x.reshape(*x.shape[:-1], num_blocks, bw)
    y = jnp.einsum("...hi,hij->...hj", xr, w)
    return y.reshape(*x.shape[:-1], num_blocks * bw)


if __name__ == "__main__":
    # Small shapes implied by the module: width=32, num_blocks=4 (block_width=8),
    # leading dims (batch=2, seq=8).
    width = 32
    num_blocks = 4
    batch, seq = 2, 8

    key = jax.random.PRNGKey(0)
    kx, kw = jax.random.split(key)
    x = jax.random.normal(kx, (batch, seq, width), dtype=jnp.float32)
    w = init_block_diag_weight(kw, width, num_blocks, w_init_variance_scale=1.0)

    # f32 path (tight tolerance).
    y = jax.block_until_ready(block_diagonal_linear(x, w))
    y_ref = _reference(x, w)
    assert y.shape == (batch, seq, width)
    assert jnp.allclose(y, y_ref, atol=1e-5, rtol=1e-5)

    # Ragged row count: exercises the pad-free partial last block.
    x_r = jax.random.normal(kx, (3, 5, width), dtype=jnp.float32)
    y_r = jax.block_until_ready(block_diagonal_linear(x_r, w))
    assert jnp.allclose(y_r, _reference(x_r, w), atol=1e-5, rtol=1e-5)

    # bf16 compute path (half HBM bytes, f32 accumulation); looser tolerance
    # vs the f32 reference.
    y_bf = jax.block_until_ready(
        block_diagonal_linear(x, w, compute_dtype=jnp.bfloat16)
    )
    assert jnp.allclose(y_bf, y_ref, atol=5e-2, rtol=5e-2)

    print("KERNEL_OK")
</pallas_src>

<mosaic_0001>
module attributes {stable_mosaic.version = 11 : i64} {
  func.func @_dense_bd_kernel(%arg0: i32, %arg1: memref<8x32xf32, #tpu.memory_space<vmem>>, %arg2: memref<32x32xf32, #tpu.memory_space<vmem>>, %arg3: memref<8x32xf32, #tpu.memory_space<vmem>>) attributes {dimension_semantics = [#tpu.dimension_semantics<parallel>], iteration_bounds = array<i64: 2>, scalar_prefetch = 0 : i64, scratch_operands = 0 : i64, tpu.core_type = #tpu.core_type<tc>, window_params = [{transform_indices = @transform_0, window_bounds = array<i64: 8, 32>}, {pipeline_mode = #tpu.pipeline_mode<synchronous>, transform_indices = @transform_1, window_bounds = array<i64: 32, 32>}, {transform_indices = @transform_2, window_bounds = array<i64: 8, 32>}]} {
    %c0 = arith.constant 0 : index
    %c0_0 = arith.constant 0 : index
    %0 = vector.load %arg1[%c0, %c0_0] : memref<8x32xf32, #tpu.memory_space<vmem>>, vector<8x32xf32>
    %c0_1 = arith.constant 0 : index
    %c0_2 = arith.constant 0 : index
    %1 = vector.load %arg2[%c0_1, %c0_2] : memref<32x32xf32, #tpu.memory_space<vmem>>, vector<32x32xf32>
    %cst = arith.constant dense<0.000000e+00> : vector<8x32xf32>
    %2 = tpu.matmul %0, %1, %cst {dimension_numbers = #tpu.dot_dimension_numbers<[1], [0], [0], [1], [0, 0, 1, 1], [], []>} : vector<8x32xf32>, vector<32x32xf32>, vector<8x32xf32> -> vector<8x32xf32>
    %c0_3 = arith.constant 0 : index
    %c0_4 = arith.constant 0 : index
    %3 = vector.load %arg3[%c0_3, %c0_4] : memref<8x32xf32, #tpu.memory_space<vmem>>, vector<8x32xf32>
    tpu.vector_store %arg3[%c0_3, %c0_4], %2 {strides = array<i32>} : memref<8x32xf32, #tpu.memory_space<vmem>>, vector<8x32xf32>,
    return
  }
  func.func @transform_0(%arg0: i32) -> (i32, i32) {
    %c0_i32 = arith.constant 0 : i32
    %c0_i32_0 = arith.constant 0 : i32
    return %arg0, %c0_i32 : i32, i32
  }
  func.func @transform_1(%arg0: i32) -> (i32, i32) {
    %c0_i32 = arith.constant 0 : i32
    %c0_i32_0 = arith.constant 0 : i32
    %c0_i32_1 = arith.constant 0 : i32
    return %c0_i32, %c0_i32_0 : i32, i32
  }
  func.func @transform_2(%arg0: i32) -> (i32, i32) {
    %c0_i32 = arith.constant 0 : i32
    %c0_i32_0 = arith.constant 0 : i32
    return %arg0, %c0_i32 : i32, i32
  }
}

</mosaic_0001>

<llo_original>
// kernel: tpu_custom_call.1
$region0: #{tpu_custom_call.1}
  #allocation0 [shape = 'u32[]', space=smem, size = 0x4, offset = 0x4, fixed_abs, tag = 'smem constant byte address 0x4 - core index']
  #allocation1 [shape = 'u32[72,128]{1,0:T(1,128)}', space=vmem, size = 0x9000, scoped, tag = 'internal scratch']
  %s0 = inlined_call_operand.hbm [shape: f32[16,32], index: 0, kind: input, shape index: {}]
  %s1 = inlined_call_operand.hbm [shape: f32[32,32], index: 1, kind: input, shape index: {}]
  %s2 = inlined_call_operand.hbm [shape: f32[16,32], index: 2, kind: output, shape index: {}]
  %s3 = sld [smem:[#allocation0]]
  $region49: #{tpu_custom_call.1} parent=0
    _
  %s5 = ssub.s32 1, %s3
  %s6 = scalar_select 0, %s5, %s3
  $region1: #{tpu_custom_call.1} parent=0
    #allocation2 [shape = 'u8[8192]{0}', space=vmem, size = 0x2000, scoped, tag = 'input window, operand 0']
    #allocation3 [shape = 's32[2]{0}', space=sflag, size = 0x8, scoped, tag = 'scoped memory for tpu_custom_call.1']
    #allocation4 [shape = 's32[2]{0}', space=sflag, size = 0x8, scoped, tag = 'scoped memory for tpu_custom_call.1']
    #allocation5 [shape = 'u8[16384]{0}', space=vmem, size = 0x4000, scoped, tag = 'input window, operand 1, single buffered']
    #allocation6 [shape = 's32[1]{0}', space=sflag, size = 0x4, scoped, tag = 'scoped memory for tpu_custom_call.1']
    #allocation7 [shape = 'u8[8192]{0}', space=vmem, size = 0x2000, scoped, tag = 'output window, operand 0']
    %7 = vsyncpa [#allocation3], 0
    %s8 = scalar_lea.sflag [#allocation3], 1
    %9 = vsyncpa %s8, 0
    %10 = vsyncpa [#allocation6], 0
    %11 = vsyncpa [#allocation4], 0
    %s12 = scalar_lea.sflag [#allocation4], 1
    %13 = vsyncpa %s12, 0
    loop: start=0, step=1, limit=4
    $region2: #{tpu_custom_call.1} parent=1 // loop_pre_header
      _
    $region3: #{tpu_custom_call.1} parent=1 // loop_header
      %s15 = sphi 0, %s19
      %p16 = scmp.ge.s32.totalorder %s15, 4
      %s25 = sphi 0, %s27
      %s28 = sphi 0, %s25
      %s29 = sphi 0, %s28
      %s45 = sphi 0, %s29
      %s49 = sphi 0, %s49
      %s51 = sphi 0, %s49
      %s52 = sphi 0, %s51
      %s66 = sphi 0, %s52
      %s72 = sphi 0, %s74
      %s75 = sphi 0, %s72
      %s76 = sphi 0, %s75
      %s92 = sphi 0, %s76
    $region4: #{tpu_custom_call.1} parent=1 // loop_header_branch
      %18 = sbr.rel (%p16) target = $region8
    $region5: #{tpu_custom_call.1} parent=1 // loop_body
      %s20 = ssub.s32 %s15, 1
      %s21 = ssub.s32 %s15, 2
      %s22 = sadd.s32 %s15, 1
      %s23 = ssub.s32 %s15, %s22
      %p24 = scmp.eq.s32.totalorder %s23, 0
      %s26 = sadd.s32 %s25, 1
      %s27 = scalar_select %p24, %s25, %s26
      %p30 = pneg %p24
      %p31 = scmp.eq.s32.totalorder %s15, 1
      %p32 = por %p30, %p31
      %p33 = scmp.ne.s32.totalorder %s25, %s28
      %p34 = scmp.eq.s32.totalorder %s15, 0
      %p35 = por %p33, %p34
      %p36 = scmp.ne.s32.totalorder %s25, %s28
      %p37 = scmp.eq.s32.totalorder %s20, 1
      %p38 = por %p36, %p37
      %p39 = scmp.ne.s32.totalorder %s28, %s29
      %p40 = scmp.eq.s32.totalorder %s20, 0
      %p41 = por %p39, %p40
      %p42 = scmp.ne.s32.totalorder %s28, %s29
      %p43 = scmp.eq.s32.totalorder %s21, 1
      %p44 = por %p42, %p43
      %p46 = scmp.ne.s32.totalorder %s29, %s45
      %p47 = scmp.eq.s32.totalorder %s21, 0
      %p48 = por %p46, %p47
      %s50 = sadd.s32 %s49, 1
      %p53 = scmp.eq.s32.totalorder %s15, 1
      %p54 = scmp.ne.s32.totalorder %s49, %s51
      %p55 = scmp.eq.s32.totalorder %s15, 0
      %p56 = por %p54, %p55
      %p57 = scmp.ne.s32.totalorder %s49, %s51
      %p58 = scmp.eq.s32.totalorder %s20, 1
      %p59 = por %p57, %p58
      %p60 = scmp.ne.s32.totalorder %s51, %s52
      %p61 = scmp.eq.s32.totalorder %s20, 0
      %p62 = por %p60, %p61
      %p63 = scmp.ne.s32.totalorder %s51, %s52
      %p64 = scmp.eq.s32.totalorder %s21, 1
      %p65 = por %p63, %p64
      %p67 = scmp.ne.s32.totalorder %s52, %s66
      %p68 = scmp.eq.s32.totalorder %s21, 0
      %p69 = por %p67, %p68
      %s70 = ssub.s32 %s15, %s22
      %p71 = scmp.eq.s32.totalorder %s70, 0
      %s73 = sadd.s32 %s72, 1
      %s74 = scalar_select %p71, %s72, %s73
      %p77 = pneg %p71
      %p78 = scmp.eq.s32.totalorder %s15, 1
      %p79 = por %p77, %p78
      %p80 = scmp.ne.s32.totalorder %s72, %s75
      %p81 = scmp.eq.s32.totalorder %s15, 0
      %p82 = por %p80, %p81
      %p83 = scmp.ne.s32.totalorder %s72, %s75
      %p84 = scmp.eq.s32.totalorder %s20, 1
      %p85 = por %p83, %p84
      %p86 = scmp.ne.s32.totalorder %s75, %s76
      %p87 = scmp.eq.s32.totalorder %s20, 0
      %p88 = por %p86, %p87
      %p89 = scmp.ne.s32.totalorder %s75, %s76
      %p90 = scmp.eq.s32.totalorder %s21, 1
      %p91 = por %p89, %p90
      %p93 = scmp.ne.s32.totalorder %s76, %s92
      %p94 = scmp.eq.s32.totalorder %s21, 0
      %p95 = por %p93, %p94
      %p96 = scmp.le.s32.totalorder 1, %s15
      %p97 = scmp.lt.s32.totalorder %s15, 3
      %p98 = pnand %p96, %p97
      %p99 = pneg %p98
      // Predicated region
      $region9: #{tpu_custom_call.1} parent=5 // pred_check
        _
      $region10: #{tpu_custom_call.1} parent=5 // pred_check_branch
        %101 = sbr.rel (%p98) target = $region12
      $region11: #{tpu_custom_call.1} parent=5 // pred_region
        %s102 = ssub.s32 %s15, 1
        // Predicated region
        $region13: #{tpu_custom_call.1} parent=11 // pred_check
          %p103 = pneg %p62
        $region14: #{tpu_custom_call.1} parent=11 // pred_check_branch
          %105 = sbr.rel (%p103) target = $region16
        $region15: #{tpu_custom_call.1} parent=11 // pred_region
          %107 = vsyncadd [#allocation6], 0
          %s108 = sshll.u32 %s1, 4
          %s109 = int_to_ptr.hbm [resolvable:$true] %s108
          %s110 = sshll.u32 [#allocation5], 4
          %s111 = int_to_ptr.vmem [resolvable:$true] %s110
          %116 = dma.hbm_to_vmem [thread:$0]  %s109, 512, %s111, [#allocation6], 128, 128, 8
        $region16: #{tpu_custom_call.1} parent=11 // pred_fallthru
          _
      $region12: #{tpu_custom_call.1} parent=5 // pred_fallthru
        _
      %p117 = scmp.lt.s32.totalorder %s15, 2
      // Predicated region
      $region17: #{tpu_custom_call.1} parent=5 // pred_check
        %p118 = pneg %p117
      $region18: #{tpu_custom_call.1} parent=5 // pred_check_branch
        %120 = sbr.rel (%p118) target = $region20
      $region19: #{tpu_custom_call.1} parent=5 // pred_region
        // Predicated region
        $region21: #{tpu_custom_call.1} parent=19 // pred_check
          %p121 = pneg %p35
        $region22: #{tpu_custom_call.1} parent=19 // pred_check_branch
          %123 = sbr.rel (%p121) target = $region24
        $region23: #{tpu_custom_call.1} parent=19 // pred_region
          %s124 = sand.u32 %s25, 1
          %s125 = scalar_lea.sflag [#allocation3], %s124
          %s126 = sand.u32 %s25, 1
          %s127 = smul.addr %s126, 8
          %s128 = scalar_lea.vmem [#allocation2], %s127
          %130 = vsyncadd %s125, 0
          %s131 = smul.addr %s15, 8
          %s132 = scalar_lea.hbm %s0, %s131
          %s134 = sshll.u32 %s132, 4
          %s135 = int_to_ptr.hbm [resolvable:$true] %s134
          %s136 = sshll.u32 %s128, 4
          %s137 = int_to_ptr.vmem [resolvable:$true] %s136
          %139 = dma.hbm_to_vmem [thread:$0]  %s135, 128, %s137, %s125
        $region24: #{tpu_custom_call.1} parent=19 // pred_fallthru
          _
      $region20: #{tpu_custom_call.1} parent=5 // pred_fallthru
        _
      %p140 = scmp.le.s32.totalorder 1, %s15
      %p141 = scmp.lt.s32.totalorder %s15, 3
      %p142 = pnand %p140, %p141
      %p143 = pneg %p142
      // Predicated region
      $region25: #{tpu_custom_call.1} parent=5 // pred_check
        _
      $region26: #{tpu_custom_call.1} parent=5 // pred_check_branch
        %145 = sbr.rel (%p142) target = $region28
      $region27: #{tpu_custom_call.1} parent=5 // pred_region
        %s146 = ssub.s32 %s15, 1
        %s147 = sand.u32 %s28, 1
        %s148 = scalar_lea.sflag [#allocation3], %s147
        %s149 = sand.u32 %s28, 1
        %s150 = smul.addr %s149, 8
        %s151 = scalar_lea.vmem [#allocation2], %s150
        // Predicated region
        $region29: #{tpu_custom_call.1} parent=27 // pred_check
          %p152 = pneg %p41
        $region30: #{tpu_custom_call.1} parent=27 // pred_check_branch
          %154 = sbr.rel (%p152) target = $region32
        $region31: #{tpu_custom_call.1} parent=27 // pred_region
          %156 = dma.done %s148, 128
        $region32: #{tpu_custom_call.1} parent=27 // pred_fallthru
          _
        // Predicated region
        $region33: #{tpu_custom_call.1} parent=27 // pred_check
          %p157 = pneg %p62
        $region34: #{tpu_custom_call.1} parent=27 // pred_check_branch
          %159 = sbr.rel (%p157) target = $region36
        $region35: #{tpu_custom_call.1} parent=27 // pred_region
          %161 = dma.done [#allocation6], 512
        $region36: #{tpu_custom_call.1} parent=27 // pred_fallthru
          _
        %s162 = sand.u32 %s28, 1
        %s163 = scalar_lea.sflag [#allocation3], %s162
        %s164 = sand.u32 %s28, 1
        %s165 = smul.addr %s164, 8
        %s166 = scalar_lea.vmem [#allocation2], %s165
        %p167 = pneg %p41
        %p168 = pneg %p38
        %p169 = pneg %p62
        %p170 = pneg %p59
        %p171 = pneg %p88
        %p172 = pneg %p85
        %s173 = sand.u32 %s75, 1
        %s174 = scalar_lea.sflag [#allocation4], %s173
        %s175 = sand.u32 %s75, 1
        %s176 = smul.addr %s175, 8
        %s177 = scalar_lea.vmem [#allocation7], %s176
        %v178 = vld [vmem:[%s151] sm:$0xff]
        %v179 = vld [vmem:[#allocation5] sm:$0xff]
        %v180 = vld [vmem:[#allocation5 + $0x8] sm:$0xff]
        %v181 = vld [vmem:[#allocation5 + $0x10] sm:$0xff]
        %v182 = vld [vmem:[#allocation5 + $0x18] sm:$0xff]
        %vm183 = vcmask 261120
        %v185 = vsel %vm183, %v178, 0
        %187 = vmatpush.msra.mxu0 0.0
        %188 = vmatpush.msra.mxu0 0.0
        %189 = vmatpush.msra.mxu0 0.0
        %190 = vmatpush.msra.mxu0 0.0
        %191 = vmatpush.msra.mxu0 0.0
        %192 = vmatpush.msra.mxu0 0.0
        %193 = vmatpush.msra.mxu0 0.0
        %194 = vmatpush.msra.mxu0 0.0
        %195 = vmatpush.msra.mxu0 0.0
        %196 = vmatpush.msra.mxu0 0.0
        %197 = vmatpush.msra.mxu0 0.0
        %198 = vmatpush.msra.mxu0 0.0
        %199 = vmatpush.msra.mxu0 %v182
        %200 = vmatpush.msra.mxu0 %v181
        %201 = vmatpush.msra.mxu0 %v180
        %202 = vmatpush.msra.mxu0 %v179
        %203 = vmatmul.f32.gmra.mxu0 %v185
        %v204 = vpop.f32.mrf.mxu0
        %v205 = vadd.f32 0.0, %v204
        %206 = vdwg.mxu0
        %207 = vst.msk [vmem:[%s177] sm:$0xff] %vm183, %v205
        %s208 = sand.u32 %s75, 1
        %s209 = scalar_lea.sflag [#allocation4], %s208
        %s210 = sand.u32 %s75, 1
        %s211 = smul.addr %s210, 8
        %s212 = scalar_lea.vmem [#allocation7], %s211
        // Predicated region
        $region37: #{tpu_custom_call.1} parent=27 // pred_check
          %p213 = pneg %p85
        $region38: #{tpu_custom_call.1} parent=27 // pred_check_branch
          %215 = sbr.rel (%p213) target = $region40
        $region39: #{tpu_custom_call.1} parent=27 // pred_region
          %217 = vsyncadd %s209, 0
          %s218 = smul.addr %s20, 8
          %s219 = scalar_lea.hbm %s2, %s218
          %s221 = sshll.u32 %s212, 4
          %s222 = int_to_ptr.vmem [resolvable:$true] %s221
          %s223 = sshll.u32 %s219, 4
          %s224 = int_to_ptr.hbm [resolvable:$true] %s223
          %226 = dma.vmem_to_hbm [thread:$0]  %s222, 128, %s224, %s209
        $region40: #{tpu_custom_call.1} parent=27 // pred_fallthru
          _
      $region28: #{tpu_custom_call.1} parent=5 // pred_fallthru
        _
      %p227 = scmp.le.s32.totalorder 2, %s15
      // Predicated region
      $region41: #{tpu_custom_call.1} parent=5 // pred_check
        %p228 = pneg %p227
      $region42: #{tpu_custom_call.1} parent=5 // pred_check_branch
        %230 = sbr.rel (%p228) target = $region44
      $region43: #{tpu_custom_call.1} parent=5 // pred_region
        %s231 = ssub.s32 %s15, 2
        // Predicated region
        $region45: #{tpu_custom_call.1} parent=43 // pred_check
          %p232 = pneg %p91
        $region46: #{tpu_custom_call.1} parent=43 // pred_check_branch
          %234 = sbr.rel (%p232) target = $region48
        $region47: #{tpu_custom_call.1} parent=43 // pred_region
          %s235 = sand.u32 %s76, 1
          %s236 = scalar_lea.sflag [#allocation4], %s235
          %s237 = sand.u32 %s76, 1
          %s238 = smul.addr %s237, 8
          %s239 = scalar_lea.vmem [#allocation7], %s238
          %241 = dma.done %s236, 128
        $region48: #{tpu_custom_call.1} parent=43 // pred_fallthru
          _
      $region44: #{tpu_custom_call.1} parent=5 // pred_fallthru
        _
    $region6: #{tpu_custom_call.1} parent=1 // loop_footer
      %s19 = sadd.s32 1, %s15
    $region7: #{tpu_custom_call.1} parent=1 // loop_footer_branch
      %14 = sbr.rel target = $region3
    $region8: #{tpu_custom_call.1} parent=1 // loop_exit
      _
    %242 = vsyncpa [#allocation3], 1
    %s243 = scalar_lea.sflag [#allocation3], 1
    %244 = vsyncpa %s243, 1
    %245 = vsyncpa [#allocation6], 1
    %246 = vsyncpa [#allocation4], 1
    %s247 = scalar_lea.sflag [#allocation4], 1
    %248 = vsyncpa %s247, 1

</llo_original>
